<compile_context>
chip_gen: v5e
topology: v5e:2x2
jax: 0.10.0
libtpu: 0.0.40
codegen_flags: <defaults>
</compile_context>

<pallas_src>
import math
import functools

import jax
import jax.numpy as jnp
from jax.experimental import pallas as pl
from jax.experimental.pallas import tpu as pltpu


def _round_up(x, m):
    return ((x + m - 1) // m) * m


def _gcn_kernel(x_ref, adj_ref, w_ref, b_ref, out_ref, acc_ref):
    """One (i, k) grid step:  acc[i] += adj[i, k] @ (x[k] @ W)."""
    k = pl.program_id(1)

    @pl.when(k == 0)
    def _init():
        acc_ref[...] = jnp.zeros_like(acc_ref)

    # support_k = x[k_tile] @ W   (bf16 MXU inputs, f32 accumulation)
    support = jnp.dot(x_ref[...], w_ref[...],
                      preferred_element_type=jnp.float32)
    # acc += adj[i_tile, k_tile] @ support_k  (cast back so the second matmul
    # also takes the fast bf16 MXU path; accumulator stays f32)
    acc_ref[...] += jnp.dot(adj_ref[...], support.astype(adj_ref.dtype),
                            preferred_element_type=jnp.float32)

    # Finalize once per output tile: add bias in f32, store lane-dense tile.
    @pl.when(k == pl.num_programs(1) - 1)
    def _finalize():
        out_ref[...] = (acc_ref[...] + b_ref[...]).astype(out_ref.dtype)


@functools.partial(jax.jit, static_argnames=("tm", "tk", "compute_dtype"))
def graph_convolution(x, adj, weight, bias=None, *,
                      tm=256, tk=512, compute_dtype=jnp.bfloat16):
    """Pallas GCN forward:  adj @ (x @ weight) + bias.

    x:      [N, F_in]     float32
    adj:    [N, N]        float32
    weight: [F_in, F_out] float32
    bias:   [F_out] or None
    returns [N, F_out]    float32
    """
    n, f_in = x.shape
    f_out = weight.shape[1]
    out_dtype = x.dtype

    # ---- padding / tile selection -----------------------------------------
    f_out_p = _round_up(f_out, 128)          # lane-dense output columns
    n128 = _round_up(n, 128)
    tm = min(tm, n128)                       # clamp tiles for small graphs
    tk = min(tk, n128)
    n_i = _round_up(n, tm)                   # output rows / adj rows
    n_k = _round_up(n, tk)                   # reduction dim (adj cols / x rows)

    # Zero padding: padded adj columns are zero, so padded x rows contribute
    # nothing; padded output rows/cols are sliced off below.
    x_p = jnp.zeros((n_k, f_in), compute_dtype).at[:n, :].set(
        x.astype(compute_dtype))
    adj_p = jnp.zeros((n_i, n_k), compute_dtype).at[:n, :n].set(
        adj.astype(compute_dtype))
    w_p = jnp.zeros((f_in, f_out_p), compute_dtype).at[:, :f_out].set(
        weight.astype(compute_dtype))
    b = jnp.zeros((f_out,), jnp.float32) if bias is None else bias
    b_p = jnp.zeros((1, f_out_p), jnp.float32).at[0, :f_out].set(
        b.astype(jnp.float32))

    grid = (n_i // tm, n_k // tk)

    cost = pl.CostEstimate(
        flops=2 * n * f_in * f_out + 2 * n * n * f_out,
        transcendentals=0,
        bytes_accessed=(x.size + adj.size + weight.size + f_out
                        + n * f_out) * 4,
    )

    out_p = pl.pallas_call(
        _gcn_kernel,
        out_shape=jax.ShapeDtypeStruct((n_i, f_out_p), out_dtype),
        grid_spec=pltpu.PrefetchScalarGridSpec(
            num_scalar_prefetch=0,
            grid=grid,
            in_specs=[
                pl.BlockSpec((tk, f_in), lambda i, k: (k, 0)),       # x
                pl.BlockSpec((tm, tk), lambda i, k: (i, k)),         # adj
                pl.BlockSpec((f_in, f_out_p), lambda i, k: (0, 0)),  # weight
                pl.BlockSpec((1, f_out_p), lambda i, k: (0, 0)),     # bias
            ],
            out_specs=pl.BlockSpec((tm, f_out_p), lambda i, k: (i, 0)),
            scratch_shapes=[pltpu.VMEM((tm, f_out_p), jnp.float32)],
        ),
        compiler_params=pltpu.CompilerParams(
            dimension_semantics=("parallel", "arbitrary")),
        cost_estimate=cost,
    )(x_p, adj_p, w_p, b_p)

    return out_p[:n, :f_out]


def init_gcn_params(key, in_features, out_features, bias=True):
    """Deterministic re-implementation of GraphConvolution.reset_parameters."""
    stdv = 1.0 / math.sqrt(out_features)
    k_w, k_b = jax.random.split(key)
    weight = jax.random.uniform(k_w, (in_features, out_features),
                                minval=-stdv, maxval=stdv, dtype=jnp.float32)
    b = None
    if bias:
        b = jax.random.uniform(k_b, (out_features,),
                               minval=-stdv, maxval=stdv, dtype=jnp.float32)
    return weight, b


if __name__ == "__main__":
    key = jax.random.PRNGKey(0)
    k_x, k_adj, k_params = jax.random.split(key, 3)

    # Small GCN problem: N nodes, F_in input features, F_out output features.
    N, F_IN, F_OUT = 64, 16, 32

    x = jax.random.normal(k_x, (N, F_IN), dtype=jnp.float32)

    # Symmetric, row-normalized adjacency.
    adj_raw = jax.random.uniform(k_adj, (N, N), dtype=jnp.float32)
    adj = (adj_raw + adj_raw.T) * 0.5
    adj = adj / jnp.sum(adj, axis=1, keepdims=True)

    weight, bias = init_gcn_params(k_params, F_IN, F_OUT, bias=True)

    out = graph_convolution(x, adj, weight, bias)
    out = jax.block_until_ready(out)
    assert out.shape == (N, F_OUT)

    # Reference replicating the kernel's bf16-input / f32-accumulate numerics.
    f32 = jnp.float32
    xb = x.astype(jnp.bfloat16).astype(f32)
    ab = adj.astype(jnp.bfloat16).astype(f32)
    wb = weight.astype(jnp.bfloat16).astype(f32)
    support_ref = jnp.dot(xb, wb, precision=jax.lax.Precision.HIGHEST)
    support_ref = support_ref.astype(jnp.bfloat16).astype(f32)
    ref = jnp.dot(ab, support_ref, precision=jax.lax.Precision.HIGHEST) + bias
    assert jnp.allclose(out, ref, atol=1e-2, rtol=1e-2), \
        float(jnp.max(jnp.abs(out - ref)))

    print("KERNEL_OK")
</pallas_src>

<mosaic_0001>
module attributes {stable_mosaic.version = 11 : i64} {
  func.func @_gcn_kernel(%arg0: i32, %arg1: i32, %arg2: memref<128x16xbf16, #tpu.memory_space<vmem>>, %arg3: memref<128x128xbf16, #tpu.memory_space<vmem>>, %arg4: memref<16x128xbf16, #tpu.memory_space<vmem>>, %arg5: memref<1x128xf32, #tpu.memory_space<vmem>>, %arg6: memref<128x128xf32, #tpu.memory_space<vmem>>, %arg7: memref<128x128xf32, #tpu.memory_space<vmem>>) attributes {dimension_semantics = [#tpu.dimension_semantics<parallel>, #tpu.dimension_semantics<arbitrary>], iteration_bounds = array<i64: 1, 1>, scalar_prefetch = 0 : i64, scratch_operands = 1 : i64, tpu.core_type = #tpu.core_type<tc>, window_params = [{transform_indices = @transform_0, window_bounds = array<i64: 128, 16>}, {transform_indices = @transform_1, window_bounds = array<i64: 128, 128>}, {pipeline_mode = #tpu.pipeline_mode<synchronous>, transform_indices = @transform_2, window_bounds = array<i64: 16, 128>}, {pipeline_mode = #tpu.pipeline_mode<synchronous>, transform_indices = @transform_3, window_bounds = array<i64: 1, 128>}, {transform_indices = @transform_4, window_bounds = array<i64: 128, 128>}]} {
    %c0_i32 = arith.constant 0 : i32
    %0 = arith.cmpi eq, %arg1, %c0_i32 : i32
    %1 = arith.extui %0 : i1 to i32
    %c0_i32_0 = arith.constant 0 : i32
    %2 = arith.cmpi ne, %1, %c0_i32_0 : i32
    scf.if %2 {
      %cst_13 = arith.constant 0.000000e+00 : f32
      %15 = vector.broadcast %cst_13 : f32 to vector<128x128xf32>
      %c0_14 = arith.constant 0 : index
      %c0_15 = arith.constant 0 : index
      %16 = vector.load %arg7[%c0_14, %c0_15] : memref<128x128xf32, #tpu.memory_space<vmem>>, vector<128x128xf32>
      tpu.vector_store %arg7[%c0_14, %c0_15], %15 {strides = array<i32>} : memref<128x128xf32, #tpu.memory_space<vmem>>, vector<128x128xf32>,
    } else {
    }
    %c0 = arith.constant 0 : index
    %c0_1 = arith.constant 0 : index
    %3 = vector.load %arg2[%c0, %c0_1] : memref<128x16xbf16, #tpu.memory_space<vmem>>, vector<128x16xbf16>
    %c0_2 = arith.constant 0 : index
    %c0_3 = arith.constant 0 : index
    %4 = vector.load %arg4[%c0_2, %c0_3] : memref<16x128xbf16, #tpu.memory_space<vmem>>, vector<16x128xbf16>
    %cst = arith.constant dense<0.000000e+00> : vector<128x128xf32>
    %5 = tpu.matmul %3, %4, %cst {dimension_numbers = #tpu.dot_dimension_numbers<[1], [0], [0], [1], [0, 0, 1, 1], [], []>} : vector<128x16xbf16>, vector<16x128xbf16>, vector<128x128xf32> -> vector<128x128xf32>
    %c0_4 = arith.constant 0 : index
    %c0_5 = arith.constant 0 : index
    %6 = vector.load %arg7[%c0_4, %c0_5] : memref<128x128xf32, #tpu.memory_space<vmem>>, vector<128x128xf32>
    %c0_6 = arith.constant 0 : index
    %c0_7 = arith.constant 0 : index
    %7 = vector.load %arg3[%c0_6, %c0_7] : memref<128x128xbf16, #tpu.memory_space<vmem>>, vector<128x128xbf16>
    %8 = arith.truncf %5 : vector<128x128xf32> to vector<128x128xbf16>
    %cst_8 = arith.constant dense<0.000000e+00> : vector<128x128xf32>
    %9 = tpu.matmul %7, %8, %cst_8 {dimension_numbers = #tpu.dot_dimension_numbers<[1], [0], [0], [1], [0, 0, 1, 1], [], []>} : vector<128x128xbf16>, vector<128x128xbf16>, vector<128x128xf32> -> vector<128x128xf32>
    %10 = arith.addf %6, %9 : vector<128x128xf32>
    %c0_9 = arith.constant 0 : index
    %c0_10 = arith.constant 0 : index
    %11 = vector.load %arg7[%c0_9, %c0_10] : memref<128x128xf32, #tpu.memory_space<vmem>>, vector<128x128xf32>
    tpu.vector_store %arg7[%c0_9, %c0_10], %10 {strides = array<i32>} : memref<128x128xf32, #tpu.memory_space<vmem>>, vector<128x128xf32>,
    %c0_i32_11 = arith.constant 0 : i32
    %12 = arith.cmpi eq, %arg1, %c0_i32_11 : i32
    %13 = arith.extui %12 : i1 to i32
    %c0_i32_12 = arith.constant 0 : i32
    %14 = arith.cmpi ne, %13, %c0_i32_12 : i32
    scf.if %14 {
      %c0_13 = arith.constant 0 : index
      %c0_14 = arith.constant 0 : index
      %15 = vector.load %arg7[%c0_13, %c0_14] : memref<128x128xf32, #tpu.memory_space<vmem>>, vector<128x128xf32>
      %c0_15 = arith.constant 0 : index
      %c0_16 = arith.constant 0 : index
      %16 = vector.load %arg5[%c0_15, %c0_16] : memref<1x128xf32, #tpu.memory_space<vmem>>, vector<1x128xf32>
      %17 = vector.broadcast %16 : vector<1x128xf32> to vector<128x128xf32>
      %18 = arith.addf %15, %17 : vector<128x128xf32>
      %c0_17 = arith.constant 0 : index
      %c0_18 = arith.constant 0 : index
      %19 = vector.load %arg6[%c0_17, %c0_18] : memref<128x128xf32, #tpu.memory_space<vmem>>, vector<128x128xf32>
      tpu.vector_store %arg6[%c0_17, %c0_18], %18 {strides = array<i32>} : memref<128x128xf32, #tpu.memory_space<vmem>>, vector<128x128xf32>,
    } else {
    }
    return
  }
  func.func @transform_0(%arg0: i32, %arg1: i32) -> (i32, i32) {
    %c0_i32 = arith.constant 0 : i32
    %c0_i32_0 = arith.constant 0 : i32
    return %arg1, %c0_i32 : i32, i32
  }
  func.func @transform_1(%arg0: i32, %arg1: i32) -> (i32, i32) {
    %c0_i32 = arith.constant 0 : i32
    return %arg0, %arg1 : i32, i32
  }
  func.func @transform_2(%arg0: i32, %arg1: i32) -> (i32, i32) {
    %c0_i32 = arith.constant 0 : i32
    %c0_i32_0 = arith.constant 0 : i32
    %c0_i32_1 = arith.constant 0 : i32
    return %c0_i32, %c0_i32_0 : i32, i32
  }
  func.func @transform_3(%arg0: i32, %arg1: i32) -> (i32, i32) {
    %c0_i32 = arith.constant 0 : i32
    %c0_i32_0 = arith.constant 0 : i32
    %c0_i32_1 = arith.constant 0 : i32
    return %c0_i32, %c0_i32_0 : i32, i32
  }
  func.func @transform_4(%arg0: i32, %arg1: i32) -> (i32, i32) {
    %c0_i32 = arith.constant 0 : i32
    %c0_i32_0 = arith.constant 0 : i32
    return %arg0, %c0_i32 : i32, i32
  }
}

</mosaic_0001>

<llo_original>
// kernel: graph_convolution.1
$region0: #{graph_convolution.1}
  #allocation0 [shape = 'u32[]', space=smem, size = 0x4, offset = 0x4, fixed_abs, tag = 'smem constant byte address 0x4 - core index']
  #allocation1 [shape = 'u32[72,128]{1,0:T(1,128)}', space=vmem, size = 0x9000, scoped, tag = 'internal scratch']
  #allocation2 [shape = 'f32[128,128]{1,0:T(8,128)}', space=vmem, size = 0x10000, scoped, tag = 'scratch operand']
  %s0 = inlined_call_operand.vmem [shape: bf16[128,16], index: 0, kind: input, shape index: {}]
  %s1 = inlined_call_operand.vmem [shape: bf16[128,128], index: 1, kind: input, shape index: {}]
  %s2 = inlined_call_operand.vmem [shape: bf16[16,128], index: 2, kind: input, shape index: {}]
  %s3 = inlined_call_operand.vmem [shape: f32[1,128], index: 3, kind: input, shape index: {}]
  %s4 = inlined_call_operand.vmem [shape: f32[128,128], index: 4, kind: output, shape index: {}]
  %s5 = sld [smem:[#allocation0]]
  $region34: #{graph_convolution.1} parent=0
    _
  %s7 = ssub.s32 1, %s5
  %s8 = scalar_select 0, %s7, %s5
  // Predicated region
  $region2: #{graph_convolution.1} parent=0 // pred_check
    _
  $region3: #{graph_convolution.1} parent=0 // pred_check_branch
    %10 = sbr.rel (0) target = $region5
  $region4: #{graph_convolution.1} parent=0 // pred_region
    _
  $region5: #{graph_convolution.1} parent=0 // pred_fallthru
    _
  // Predicated region
  $region6: #{graph_convolution.1} parent=0 // pred_check
    _
  $region7: #{graph_convolution.1} parent=0 // pred_check_branch
    %12 = sbr.rel (0) target = $region9
  $region8: #{graph_convolution.1} parent=0 // pred_region
    _
  $region9: #{graph_convolution.1} parent=0 // pred_fallthru
    _
  // Predicated region
  $region10: #{graph_convolution.1} parent=0 // pred_check
    _
  $region11: #{graph_convolution.1} parent=0 // pred_check_branch
    %14 = sbr.rel (0) target = $region13
  $region12: #{graph_convolution.1} parent=0 // pred_region
    _
  $region13: #{graph_convolution.1} parent=0 // pred_fallthru
    _
  // Predicated region
  $region14: #{graph_convolution.1} parent=0 // pred_check
    _
  $region15: #{graph_convolution.1} parent=0 // pred_check_branch
    %16 = sbr.rel (0) target = $region17
  $region16: #{graph_convolution.1} parent=0 // pred_region
    _
  $region17: #{graph_convolution.1} parent=0 // pred_fallthru
    _
  %p18 = scmp.eq.s32.totalorder 0, 0
  // Predicated region
  $region18: #{graph_convolution.1} parent=0 // pred_check
    %p19 = pneg %p18
  $region19: #{graph_convolution.1} parent=0 // pred_check_branch
    %21 = sbr.rel (%p19) target = $region21
  $region20: #{graph_convolution.1} parent=0 // pred_region
    %22 = vst [vmem:[#allocation2] sm:$0xff] 0.0
    %23 = vst [vmem:[#allocation2 + $0x8] sm:$0xff] 0.0
    %24 = vst [vmem:[#allocation2 + $0x10] sm:$0xff] 0.0
    %25 = vst [vmem:[#allocation2 + $0x18] sm:$0xff] 0.0
    %26 = vst [vmem:[#allocation2 + $0x20] sm:$0xff] 0.0
    %27 = vst [vmem:[#allocation2 + $0x28] sm:$0xff] 0.0
    %28 = vst [vmem:[#allocation2 + $0x30] sm:$0xff] 0.0
    %29 = vst [vmem:[#allocation2 + $0x38] sm:$0xff] 0.0
    %30 = vst [vmem:[#allocation2 + $0x40] sm:$0xff] 0.0
    %31 = vst [vmem:[#allocation2 + $0x48] sm:$0xff] 0.0
    %32 = vst [vmem:[#allocation2 + $0x50] sm:$0xff] 0.0
    %33 = vst [vmem:[#allocation2 + $0x58] sm:$0xff] 0.0
    %34 = vst [vmem:[#allocation2 + $0x60] sm:$0xff] 0.0
    %35 = vst [vmem:[#allocation2 + $0x68] sm:$0xff] 0.0
    %36 = vst [vmem:[#allocation2 + $0x70] sm:$0xff] 0.0
    %37 = vst [vmem:[#allocation2 + $0x78] sm:$0xff] 0.0
  $region21: #{graph_convolution.1} parent=0 // pred_fallthru
    _
  %v38 = vld [vmem:[%s0] sm:$0xf]
  %v39 = vld [vmem:[%s0 + $0x4] sm:$0xf]
  %v40 = vld [vmem:[%s0 + $0x8] sm:$0xf]
  %v41 = vld [vmem:[%s0 + $0xc] sm:$0xf]
  %v42 = vld [vmem:[%s0 + $0x10] sm:$0xf]
  %v43 = vld [vmem:[%s0 + $0x14] sm:$0xf]
  %v44 = vld [vmem:[%s0 + $0x18] sm:$0xf]
  %v45 = vld [vmem:[%s0 + $0x1c] sm:$0xf]
  %v46 = vld [vmem:[%s0 + $0x20] sm:$0xf]
  %v47 = vld [vmem:[%s0 + $0x24] sm:$0xf]
  %v48 = vld [vmem:[%s0 + $0x28] sm:$0xf]
  %v49 = vld [vmem:[%s0 + $0x2c] sm:$0xf]
  %v50 = vld [vmem:[%s0 + $0x30] sm:$0xf]
  %v51 = vld [vmem:[%s0 + $0x34] sm:$0xf]
  %v52 = vld [vmem:[%s0 + $0x38] sm:$0xf]
  %v53 = vld [vmem:[%s0 + $0x3c] sm:$0xf]
  %v54 = vld [vmem:[%s2] sm:$0xf]
  %v55 = vld [vmem:[%s2 + $0x4] sm:$0xf]
  %v72 = vunpack.c.l.b16 %v38
  %v73 = vunpack.c.l.b16 %v39
  %v74 = vunpack.c.l.b16 %v40
  %v75 = vunpack.c.l.b16 %v41
  %v76 = vunpack.c.l.b16 %v42
  %v77 = vunpack.c.l.b16 %v43
  %v78 = vunpack.c.l.b16 %v44
  %v79 = vunpack.c.l.b16 %v45
  %v80 = vunpack.c.l.b16 %v46
  %v81 = vunpack.c.l.b16 %v47
  %v82 = vunpack.c.l.b16 %v48
  %v83 = vunpack.c.l.b16 %v49
  %v84 = vunpack.c.l.b16 %v50
  %v85 = vunpack.c.l.b16 %v51
  %v86 = vunpack.c.l.b16 %v52
  %v87 = vunpack.c.l.b16 %v53
  %v88 = vpack.c.b16 %v73, %v72
  %v89 = vpack.c.b16 %v75, %v74
  %v90 = vpack.c.b16 %v77, %v76
  %v91 = vpack.c.b16 %v79, %v78
  %v92 = vpack.c.b16 %v81, %v80
  %v93 = vpack.c.b16 %v83, %v82
  %v94 = vpack.c.b16 %v85, %v84
  %v95 = vpack.c.b16 %v87, %v86
  %v98 = vunpack.c.l.b16 %v54
  %v99 = vunpack.c.l.b16 %v55
  %v100 = vpack.c.b16 %v99, %v98
  %vm102 = vcmask 130048
  %v104 = vsel %vm102, %v88, 0
  %v107 = vsel %vm102, %v89, 0
  %v110 = vsel %vm102, %v90, 0
  %v113 = vsel %vm102, %v91, 0
  %v116 = vsel %vm102, %v92, 0
  %v119 = vsel %vm102, %v93, 0
  %v122 = vsel %vm102, %v94, 0
  %v125 = vsel %vm102, %v95, 0
  %127 = vmatpush.bf16.msra.mxu0 0
  %128 = vmatpush.bf16.msra.mxu0 0
  %129 = vmatpush.bf16.msra.mxu0 0
  %130 = vmatpush.bf16.msra.mxu0 0
  %131 = vmatpush.bf16.msra.mxu0 0
  %132 = vmatpush.bf16.msra.mxu0 0
  %133 = vmatpush.bf16.msra.mxu0 0
  %134 = vmatpush.bf16.msra.mxu0 %v100
  %135 = vmatmul.bf16.gmra.mxu0 %v104
  %v136 = vpop.f32.mrf.mxu0
  %v137 = vadd.f32 0.0, %v136
  %v138 = vpop.f32.mrf.mxu0
  %v139 = vadd.f32 0.0, %v138
  %140 = vmatmul.bf16.gmra.mxu0 %v107
  %v141 = vpop.f32.mrf.mxu0
  %v142 = vadd.f32 0.0, %v141
  %v143 = vpop.f32.mrf.mxu0
  %v144 = vadd.f32 0.0, %v143
  %145 = vmatmul.bf16.gmra.mxu0 %v110
  %v146 = vpop.f32.mrf.mxu0
  %v147 = vadd.f32 0.0, %v146
  %v148 = vpop.f32.mrf.mxu0
  %v149 = vadd.f32 0.0, %v148
  %150 = vmatmul.bf16.gmra.mxu0 %v113
  %v151 = vpop.f32.mrf.mxu0
  %v152 = vadd.f32 0.0, %v151
  %v153 = vpop.f32.mrf.mxu0
  %v154 = vadd.f32 0.0, %v153
  %155 = vmatmul.bf16.gmra.mxu0 %v116
  %v156 = vpop.f32.mrf.mxu0
  %v157 = vadd.f32 0.0, %v156
  %v158 = vpop.f32.mrf.mxu0
  %v159 = vadd.f32 0.0, %v158
  %160 = vmatmul.bf16.gmra.mxu0 %v119
  %v161 = vpop.f32.mrf.mxu0
  %v162 = vadd.f32 0.0, %v161
  %v163 = vpop.f32.mrf.mxu0
  %v164 = vadd.f32 0.0, %v163
  %165 = vmatmul.bf16.gmra.mxu0 %v122
  %v166 = vpop.f32.mrf.mxu0
  %v167 = vadd.f32 0.0, %v166
  %v168 = vpop.f32.mrf.mxu0
  %v169 = vadd.f32 0.0, %v168
  %170 = vmatmul.bf16.gmra.mxu0 %v125
  %v171 = vpop.f32.mrf.mxu0
  %v172 = vadd.f32 0.0, %v171
  %v173 = vpop.f32.mrf.mxu0
  %v174 = vadd.f32 0.0, %v173
  %175 = vdwg.mxu0
  %v176 = vld [vmem:[#allocation2] sm:$0xff]
  %v177 = vld [vmem:[#allocation2 + $0x8] sm:$0xff]
  %v178 = vld [vmem:[#allocation2 + $0x10] sm:$0xff]
  %v179 = vld [vmem:[#allocation2 + $0x18] sm:$0xff]
  %v180 = vld [vmem:[#allocation2 + $0x20] sm:$0xff]
  %v181 = vld [vmem:[#allocation2 + $0x28] sm:$0xff]
  %v182 = vld [vmem:[#allocation2 + $0x30] sm:$0xff]
  %v183 = vld [vmem:[#allocation2 + $0x38] sm:$0xff]
  %v184 = vld [vmem:[#allocation2 + $0x40] sm:$0xff]
  %v185 = vld [vmem:[#allocation2 + $0x48] sm:$0xff]
  %v186 = vld [vmem:[#allocation2 + $0x50] sm:$0xff]
  %v187 = vld [vmem:[#allocation2 + $0x58] sm:$0xff]
  %v188 = vld [vmem:[#allocation2 + $0x60] sm:$0xff]
  %v189 = vld [vmem:[#allocation2 + $0x68] sm:$0xff]
  %v190 = vld [vmem:[#allocation2 + $0x70] sm:$0xff]
  %v191 = vld [vmem:[#allocation2 + $0x78] sm:$0xff]
  %v192 = vld [vmem:[%s1] sm:$0xf]
  %v193 = vld [vmem:[%s1 + $0x4] sm:$0xf]
  %v194 = vld [vmem:[%s1 + $0x8] sm:$0xf]
  %v195 = vld [vmem:[%s1 + $0xc] sm:$0xf]
  %v196 = vld [vmem:[%s1 + $0x10] sm:$0xf]
  %v197 = vld [vmem:[%s1 + $0x14] sm:$0xf]
  %v198 = vld [vmem:[%s1 + $0x18] sm:$0xf]
  %v199 = vld [vmem:[%s1 + $0x1c] sm:$0xf]
  %v200 = vld [vmem:[%s1 + $0x20] sm:$0xf]
  %v201 = vld [vmem:[%s1 + $0x24] sm:$0xf]
  %v202 = vld [vmem:[%s1 + $0x28] sm:$0xf]
  %v203 = vld [vmem:[%s1 + $0x2c] sm:$0xf]
  %v204 = vld [vmem:[%s1 + $0x30] sm:$0xf]
  %v205 = vld [vmem:[%s1 + $0x34] sm:$0xf]
  %v206 = vld [vmem:[%s1 + $0x38] sm:$0xf]
  %v207 = vld [vmem:[%s1 + $0x3c] sm:$0xf]
  %v208 = vpack.c.bf16 %v139, %v137
  %v209 = vpack.c.bf16 %v144, %v142
  %v210 = vpack.c.bf16 %v149, %v147
  %v211 = vpack.c.bf16 %v154, %v152
  %v212 = vpack.c.bf16 %v159, %v157
  %v213 = vpack.c.bf16 %v164, %v162
  %v214 = vpack.c.bf16 %v169, %v167
  %v215 = vpack.c.bf16 %v174, %v172
  %v232 = vunpack.c.l.b16 %v192
  %v233 = vunpack.c.l.b16 %v193
  %v234 = vunpack.c.l.b16 %v194
  %v235 = vunpack.c.l.b16 %v195
  %v236 = vunpack.c.l.b16 %v196
  %v237 = vunpack.c.l.b16 %v197
  %v238 = vunpack.c.l.b16 %v198
  %v239 = vunpack.c.l.b16 %v199
  %v240 = vunpack.c.l.b16 %v200
  %v241 = vunpack.c.l.b16 %v201
  %v242 = vunpack.c.l.b16 %v202
  %v243 = vunpack.c.l.b16 %v203
  %v244 = vunpack.c.l.b16 %v204
  %v245 = vunpack.c.l.b16 %v205
  %v246 = vunpack.c.l.b16 %v206
  %v247 = vunpack.c.l.b16 %v207
  %v248 = vpack.c.b16 %v233, %v232
  %v249 = vpack.c.b16 %v235, %v234
  %v250 = vpack.c.b16 %v237, %v236
  %v251 = vpack.c.b16 %v239, %v238
  %v252 = vpack.c.b16 %v241, %v240
  %v253 = vpack.c.b16 %v243, %v242
  %v254 = vpack.c.b16 %v245, %v244
  %v255 = vpack.c.b16 %v247, %v246
  %264 = vmatpush.bf16.msra.mxu0 %v215
  %265 = vmatpush.bf16.msra.mxu0 %v214
  %266 = vmatpush.bf16.msra.mxu0 %v213
  %267 = vmatpush.bf16.msra.mxu0 %v212
  %268 = vmatpush.bf16.msra.mxu0 %v211
  %269 = vmatpush.bf16.msra.mxu0 %v210
  %270 = vmatpush.bf16.msra.mxu0 %v209
  %271 = vmatpush.bf16.msra.mxu0 %v208
  %272 = vmatmul.bf16.gmra.mxu0 %v248
  %v273 = vpop.f32.mrf.mxu0
  %v274 = vadd.f32 0.0, %v273
  %v275 = vpop.f32.mrf.mxu0
  %v276 = vadd.f32 0.0, %v275
  %277 = vmatmul.bf16.gmra.mxu0 %v249
  %v278 = vpop.f32.mrf.mxu0
  %v279 = vadd.f32 0.0, %v278
  %v280 = vpop.f32.mrf.mxu0
  %v281 = vadd.f32 0.0, %v280
  %282 = vmatmul.bf16.gmra.mxu0 %v250
  %v283 = vpop.f32.mrf.mxu0
  %v284 = vadd.f32 0.0, %v283
  %v285 = vpop.f32.mrf.mxu0
  %v286 = vadd.f32 0.0, %v285
  %287 = vmatmul.bf16.gmra.mxu0 %v251
  %v288 = vpop.f32.mrf.mxu0
  %v289 = vadd.f32 0.0, %v288
  %v290 = vpop.f32.mrf.mxu0
  %v291 = vadd.f32 0.0, %v290
  %292 = vmatmul.bf16.gmra.mxu0 %v252
  %v293 = vpop.f32.mrf.mxu0
  %v294 = vadd.f32 0.0, %v293
  %v295 = vpop.f32.mrf.mxu0
  %v296 = vadd.f32 0.0, %v295
  %297 = vmatmul.bf16.gmra.mxu0 %v253
  %v298 = vpop.f32.mrf.mxu0
  %v299 = vadd.f32 0.0, %v298
  %v300 = vpop.f32.mrf.mxu0
  %v301 = vadd.f32 0.0, %v300
  %302 = vmatmul.bf16.gmra.mxu0 %v254
  %v303 = vpop.f32.mrf.mxu0
  %v304 = vadd.f32 0.0, %v303
  %v305 = vpop.f32.mrf.mxu0
  %v306 = vadd.f32 0.0, %v305
  %307 = vmatmul.bf16.gmra.mxu0 %v255
  %v308 = vpop.f32.mrf.mxu0
  %v309 = vadd.f32 0.0, %v308
  %v310 = vpop.f32.mrf.mxu0
  %v311 = vadd.f32 0.0, %v310
  %312 = vdwg.mxu0
  %v313 = vadd.f32 %v176, %v274
  %v314 = vadd.f32 %v177, %v276
  %v315 = vadd.f32 %v178, %v279
  %v316 = vadd.f32 %v179, %v281
  %v317 = vadd.f32 %v180, %v284
  %v318 = vadd.f32 %v181, %v286
  %v319 = vadd.f32 %v182, %v289
  %v320 = vadd.f32 %v183, %v291
  %v321 = vadd.f32 %v184, %v294
  %v322 = vadd.f32 %v185, %v296
  %v323 = vadd.f32 %v186, %v299
  %v324 = vadd.f32 %v187, %v301
  %v325 = vadd.f32 %v188, %v304
  %v326 = vadd.f32 %v189, %v306
  %v327 = vadd.f32 %v190, %v309
  %v328 = vadd.f32 %v191, %v311
  %329 = vst [vmem:[#allocation2] sm:$0xff] %v313
  %330 = vst [vmem:[#allocation2 + $0x8] sm:$0xff] %v314
  %331 = vst [vmem:[#allocation2 + $0x10] sm:$0xff] %v315
  %332 = vst [vmem:[#allocation2 + $0x18] sm:$0xff] %v316
  %333 = vst [vmem:[#allocation2 + $0x20] sm:$0xff] %v317
  %334 = vst [vmem:[#allocation2 + $0x28] sm:$0xff] %v318
  %335 = vst [vmem:[#allocation2 + $0x30] sm:$0xff] %v319
  %336 = vst [vmem:[#allocation2 + $0x38] sm:$0xff] %v320
  %337 = vst [vmem:[#allocation2 + $0x40] sm:$0xff] %v321
  %338 = vst [vmem:[#allocation2 + $0x48] sm:$0xff] %v322
  %339 = vst [vmem:[#allocation2 + $0x50] sm:$0xff] %v323
  %340 = vst [vmem:[#allocation2 + $0x58] sm:$0xff] %v324
  %341 = vst [vmem:[#allocation2 + $0x60] sm:$0xff] %v325
  %342 = vst [vmem:[#allocation2 + $0x68] sm:$0xff] %v326
  %343 = vst [vmem:[#allocation2 + $0x70] sm:$0xff] %v327
  %344 = vst [vmem:[#allocation2 + $0x78] sm:$0xff] %v328
  // Predicated region
  $region22: #{graph_convolution.1} parent=0 // pred_check
    %p345 = pneg %p18
  $region23: #{graph_convolution.1} parent=0 // pred_check_branch
    %347 = sbr.rel (%p345) target = $region25
  $region24: #{graph_convolution.1} parent=0 // pred_region
    %v348 = vld [vmem:[#allocation2] sm:$0xff]
    %v349 = vld [vmem:[#allocation2 + $0x8] sm:$0xff]
    %v350 = vld [vmem:[#allocation2 + $0x10] sm:$0xff]
    %v351 = vld [vmem:[#allocation2 + $0x18] sm:$0xff]
    %v352 = vld [vmem:[#allocation2 + $0x20] sm:$0xff]
    %v353 = vld [vmem:[#allocation2 + $0x28] sm:$0xff]
    %v354 = vld [vmem:[#allocation2 + $0x30] sm:$0xff]
    %v355 = vld [vmem:[#allocation2 + $0x38] sm:$0xff]
    %v356 = vld [vmem:[#allocation2 + $0x40] sm:$0xff]
    %v357 = vld [vmem:[#allocation2 + $0x48] sm:$0xff]
    %v358 = vld [vmem:[#allocation2 + $0x50] sm:$0xff]
    %v359 = vld [vmem:[#allocation2 + $0x58] sm:$0xff]
    %v360 = vld [vmem:[#allocation2 + $0x60] sm:$0xff]
    %v361 = vld [vmem:[#allocation2 + $0x68] sm:$0xff]
    %v362 = vld [vmem:[#allocation2 + $0x70] sm:$0xff]
    %v363 = vld [vmem:[#allocation2 + $0x78] sm:$0xff]
    %v364 = vld [vmem:[%s3] sm:$0x1]
    %v366 = vperm.slane %v364, 0
    %v368 = vadd.f32 %v348, %v366
    %v369 = vadd.f32 %v349, %v366
    %v370 = vadd.f32 %v350, %v366
    %v371 = vadd.f32 %v351, %v366
    %v372 = vadd.f32 %v352, %v366
    %v373 = vadd.f32 %v353, %v366
    %v374 = vadd.f32 %v354, %v366
    %v375 = vadd.f32 %v355, %v366
    %v376 = vadd.f32 %v356, %v366
    %v377 = vadd.f32 %v357, %v366
    %v378 = vadd.f32 %v358, %v366
    %v379 = vadd.f32 %v359, %v366
    %v380 = vadd.f32 %v360, %v366
    %v381 = vadd.f32 %v361, %v366
    %v382 = vadd.f32 %v362, %v366
    %v383 = vadd.f32 %v363, %v366
    %384 = vst [vmem:[%s4] sm:$0xff] %v368
    %385 = vst [vmem:[%s4 + $0x8] sm:$0xff] %v369
    %386 = vst [vmem:[%s4 + $0x10] sm:$0xff] %v370
    %387 = vst [vmem:[%s4 + $0x18] sm:$0xff] %v371
    %388 = vst [vmem:[%s4 + $0x20] sm:$0xff] %v372
    %389 = vst [vmem:[%s4 + $0x28] sm:$0xff] %v373
    %390 = vst [vmem:[%s4 + $0x30] sm:$0xff] %v374
    %391 = vst [vmem:[%s4 + $0x38] sm:$0xff] %v375
    %392 = vst [vmem:[%s4 + $0x40] sm:$0xff] %v376
    %393 = vst [vmem:[%s4 + $0x48] sm:$0xff] %v377
    %394 = vst [vmem:[%s4 + $0x50] sm:$0xff] %v378
    %395 = vst [vmem:[%s4 + $0x58] sm:$0xff] %v379
    %396 = vst [vmem:[%s4 + $0x60] sm:$0xff] %v380
    %397 = vst [vmem:[%s4 + $0x68] sm:$0xff] %v381
    %398 = vst [vmem:[%s4 + $0x70] sm:$0xff] %v382
    %399 = vst [vmem:[%s4 + $0x78] sm:$0xff] %v383
  $region25: #{graph_convolution.1} parent=0 // pred_fallthru
    _
  // Predicated region
  $region26: #{graph_convolution.1} parent=0 // pred_check
    _
  $region27: #{graph_convolution.1} parent=0 // pred_check_branch
    %401 = sbr.rel (0) target = $region29
  $region28: #{graph_convolution.1} parent=0 // pred_region
    _
  $region29: #{graph_convolution.1} parent=0 // pred_fallthru
    _
  // Predicated region
  $region30: #{graph_convolution.1} parent=0 // pred_check
    _
  $region31: #{graph_convolution.1} parent=0 // pred_check_branch
    %403 = sbr.rel (0) target = $region33
  $region32: #{graph_convolution.1} parent=0 // pred_region
    _
  $region33: #{graph_convolution.1} parent=0 // pred_fallthru
    _

</llo_original>
